<compile_context>
chip_gen: v7x
topology: tpu7x:2x2x1
jax: 0.10.0
libtpu: 0.0.40
codegen_flags: <defaults>
</compile_context>

<pallas_src>
import jax
import jax.numpy as jnp
from jax.experimental import pallas as pl
from jax.experimental.pallas import tpu as pltpu


def _total_loss_kernel(w_ref, p_ref, wm_ref, adv_ref, o_ref):
    # All refs live in SMEM; everything runs on the scalar ALU slots.
    #   w_ref:   (3,) f32 -> [perceptual_weight, watermark_weight, adversarial_weight]
    #   p_ref:   (1,) f32 -> perceptual loss
    #   wm_ref:  (1,) f32 -> watermark loss
    #   adv_ref: (1,) f32 -> adversarial loss
    #   o_ref:   (1,) f32 -> total loss
    o_ref[0] = (w_ref[0] * p_ref[0]
                + w_ref[1] * wm_ref[0]
                + w_ref[2] * adv_ref[0])


# Grid-less, SMEM-only call: 28 bytes in, 4 bytes out, 3 scalar FMAs.
_total_loss_call = pl.pallas_call(
    _total_loss_kernel,
    out_shape=jax.ShapeDtypeStruct((1,), jnp.float32),
    in_specs=[
        pl.BlockSpec(memory_space=pltpu.SMEM),  # (3,) weights
        pl.BlockSpec(memory_space=pltpu.SMEM),  # (1,) perceptual
        pl.BlockSpec(memory_space=pltpu.SMEM),  # (1,) watermark
        pl.BlockSpec(memory_space=pltpu.SMEM),  # (1,) adversarial
    ],
    out_specs=pl.BlockSpec(memory_space=pltpu.SMEM),
    cost_estimate=pl.CostEstimate(flops=6, transcendentals=0, bytes_accessed=32),
)


@jax.jit
def _total_loss(weights, perceptual, watermark, adversarial):
    # Reshape 0-d scalars to (1,): a layout-trivial bitcast, not a concat —
    # there is no separate concatenate HLO / HBM round-trip before the call.
    p = jnp.asarray(perceptual, dtype=jnp.float32).reshape(1)
    w = jnp.asarray(watermark, dtype=jnp.float32).reshape(1)
    a = jnp.asarray(adversarial, dtype=jnp.float32).reshape(1)
    return _total_loss_call(weights, p, w, a)[0]  # 0-d scalar result


def make_total_loss(perceptual_weight, watermark_weight, adversarial_loss):
    """Pallas equivalent of TotalLoss(__init__ weights).forward.

    Note: `adversarial_loss` is actually the adversarial *weight* (the name is
    kept only to match the PyTorch module's constructor argument). Do NOT pass
    a loss tensor here.

    All weight configurations share the single module-level jitted executable;
    building a new TotalLoss never triggers a Mosaic recompile.
    """
    weights = jnp.asarray(
        [float(perceptual_weight), float(watermark_weight), float(adversarial_loss)],
        dtype=jnp.float32,
    )

    def total_loss(perceptual, watermark, adversarial):
        return _total_loss(weights, perceptual, watermark, adversarial)

    return total_loss


if __name__ == "__main__":
    key = jax.random.PRNGKey(0)
    kp, kw, ka = jax.random.split(key, 3)

    # Deterministic example scalar losses (as the upstream loss modules would produce).
    perceptual = jax.random.uniform(kp, (), dtype=jnp.float32)
    watermark = jax.random.uniform(kw, (), dtype=jnp.float32)
    adversarial = jax.random.uniform(ka, (), dtype=jnp.float32)

    # Deterministic "module init" weights.
    perceptual_weight = 0.7
    watermark_weight = 0.2
    adversarial_loss_weight = 0.1

    total_loss = make_total_loss(
        perceptual_weight, watermark_weight, adversarial_loss_weight
    )

    result = total_loss(perceptual, watermark, adversarial)
    result = jax.block_until_ready(result)

    # Reference check in plain JAX (matches the PyTorch forward exactly).
    expected = (perceptual_weight * perceptual
                + watermark_weight * watermark
                + adversarial_loss_weight * adversarial)
    assert jnp.allclose(result, expected, rtol=1e-6, atol=1e-6), (result, expected)

    # A second weight configuration reuses the same compiled executable
    # (weights are a runtime SMEM operand, not baked constants).
    total_loss2 = make_total_loss(0.3, 0.5, 0.2)
    result2 = jax.block_until_ready(total_loss2(perceptual, watermark, adversarial))
    expected2 = 0.3 * perceptual + 0.5 * watermark + 0.2 * adversarial
    assert jnp.allclose(result2, expected2, rtol=1e-6, atol=1e-6), (result2, expected2)

    print("KERNEL_OK")
</pallas_src>

<mosaic_0001>
module attributes {stable_mosaic.version = 11 : i64} {
  func.func @_total_loss_kernel(%arg0: memref<3xf32, #tpu.memory_space<smem>>, %arg1: memref<1xf32, #tpu.memory_space<smem>>, %arg2: memref<1xf32, #tpu.memory_space<smem>>, %arg3: memref<1xf32, #tpu.memory_space<smem>>, %arg4: memref<1xf32, #tpu.memory_space<smem>>) attributes {dimension_semantics = [], scalar_prefetch = 0 : i64, scratch_operands = 0 : i64, tpu.core_type = #tpu.core_type<tc>} {
    %c0 = arith.constant 0 : index
    %0 = memref.load %arg0[%c0] : memref<3xf32, #tpu.memory_space<smem>>
    %c0_0 = arith.constant 0 : index
    %1 = memref.load %arg1[%c0_0] : memref<1xf32, #tpu.memory_space<smem>>
    %2 = arith.mulf %0, %1 : f32
    %c1 = arith.constant 1 : index
    %3 = memref.load %arg0[%c1] : memref<3xf32, #tpu.memory_space<smem>>
    %c0_1 = arith.constant 0 : index
    %4 = memref.load %arg2[%c0_1] : memref<1xf32, #tpu.memory_space<smem>>
    %5 = arith.mulf %3, %4 : f32
    %6 = arith.addf %2, %5 : f32
    %c2 = arith.constant 2 : index
    %7 = memref.load %arg0[%c2] : memref<3xf32, #tpu.memory_space<smem>>
    %c0_2 = arith.constant 0 : index
    %8 = memref.load %arg3[%c0_2] : memref<1xf32, #tpu.memory_space<smem>>
    %9 = arith.mulf %7, %8 : f32
    %10 = arith.addf %6, %9 : f32
    %c0_3 = arith.constant 0 : index
    %11 = memref.load %arg4[%c0_3] : memref<1xf32, #tpu.memory_space<smem>>
    memref.store %10, %arg4[%c0_3] : memref<1xf32, #tpu.memory_space<smem>>
    return
  }
}

</mosaic_0001>

<llo_original>
// kernel: _total_loss.1
$region0: #{_total_loss.1}
  #allocation0 [shape = 'u32[]', space=smem, size = 0x4, offset = 0x4, fixed_abs, tag = 'smem constant byte address 0x4 - core index']
  #allocation1 [shape = 'u32[144,128]{1,0:T(1,128)}', space=vmem, size = 0x12000, scoped, tag = 'internal scratch']
  #allocation2 [shape = 'f32[1]{0:T(128)S(6)}', space=smem, size = 0x200, scoped, tag = 'scoped memory for _total_loss.1']
  #allocation3 [shape = 'f32[1]{0:T(128)S(6)}', space=smem, size = 0x200, scoped, tag = 'scoped memory for _total_loss.1']
  #allocation4 [shape = 'f32[1]{0:T(128)S(6)}', space=smem, size = 0x200, scoped, tag = 'scoped memory for _total_loss.1']
  %s0 = inlined_call_operand.vmem [shape: f32[3], index: 0, kind: input, shape index: {}]
  %s1 = inlined_call_operand.<no memory space> [shape: f32[1], index: 1, kind: input, shape index: {}]
  %s2 = inlined_call_operand.<no memory space> [shape: f32[1], index: 2, kind: input, shape index: {}]
  %s3 = inlined_call_operand.<no memory space> [shape: f32[1], index: 3, kind: input, shape index: {}]
  %s4 = inlined_call_operand.hbm [shape: f32[1], index: 4, kind: output, shape index: {}]
  %s5 = sld [smem:[#allocation0]]
  $region30: #{_total_loss.1} parent=0
    _
  %s7 = ssub.s32 1, %s5
  %s8 = scalar_select 0, %s7, %s5
  %9 = sst [smem:[#allocation2]] %s1
  %10 = sst [smem:[#allocation3]] %s2
  %11 = sst [smem:[#allocation4]] %s3
  $region1: #{_total_loss.1} parent=0
    #allocation5 [shape = 'u8[512]{0}', space=smem, size = 0x200, scoped, tag = 'input window, operand 0, single buffered']
    #allocation6 [shape = 's32[1]{0}', space=sflag, size = 0x4, scoped, tag = 'scoped memory for _total_loss.1']
    #allocation7 [shape = 's32[1]{0}', space=sflag, size = 0x4, scoped, tag = 'scoped memory for _total_loss.1']
    #allocation8 [shape = 'u8[512]{0}', space=smem, size = 0x200, scoped, tag = 'output window, operand 0, single buffered']
    %12 = vsyncpa [#allocation7], 0
    %13 = vsyncpa [#allocation6], 0
    // Predicated region
    $region2: #{_total_loss.1} parent=1 // pred_check
      _
    $region3: #{_total_loss.1} parent=1 // pred_check_branch
      %15 = sbr.rel (0) target = $region5
    $region4: #{_total_loss.1} parent=1 // pred_region
      %s17 = ssub.s32 16, 16
      %18 = vsyncadd [#allocation7], %s17
      %s20 = sshll.u32 %s0, 4
      %s21 = int_to_ptr.vmem [resolvable:$true] %s20
      %23 = dma.vmem_to_smem %s21, 16, [#allocation5], [#allocation7]
    $region5: #{_total_loss.1} parent=1 // pred_fallthru
      _
    // Predicated region
    $region6: #{_total_loss.1} parent=1 // pred_check
      _
    $region7: #{_total_loss.1} parent=1 // pred_check_branch
      %25 = sbr.rel (0) target = $region9
    $region8: #{_total_loss.1} parent=1 // pred_region
      _
    $region9: #{_total_loss.1} parent=1 // pred_fallthru
      _
    // Predicated region
    $region10: #{_total_loss.1} parent=1 // pred_check
      _
    $region11: #{_total_loss.1} parent=1 // pred_check_branch
      %27 = sbr.rel (0) target = $region13
    $region12: #{_total_loss.1} parent=1 // pred_region
      _
    $region13: #{_total_loss.1} parent=1 // pred_fallthru
      _
    // Predicated region
    $region14: #{_total_loss.1} parent=1 // pred_check
      _
    $region15: #{_total_loss.1} parent=1 // pred_check_branch
      %29 = sbr.rel (0) target = $region17
    $region16: #{_total_loss.1} parent=1 // pred_region
      _
    $region17: #{_total_loss.1} parent=1 // pred_fallthru
      _
    // Predicated region
    $region18: #{_total_loss.1} parent=1 // pred_check
      _
    $region19: #{_total_loss.1} parent=1 // pred_check_branch
      %31 = sbr.rel (0) target = $region21
    $region20: #{_total_loss.1} parent=1 // pred_region
      %32 = dma.done [#allocation7], 16
    $region21: #{_total_loss.1} parent=1 // pred_fallthru
      _
    %33 = sfence
    %s34 = sld [smem:[#allocation5]]
    %s35 = sld [smem:[#allocation2]]
    %s36 = smul.f32 %s34, %s35
    %s37 = sld [smem:[#allocation5 + $0x1]]
    %s38 = sld [smem:[#allocation3]]
    %s39 = smul.f32 %s37, %s38
    %s40 = sadd.f32 %s36, %s39
    %s41 = sld [smem:[#allocation5 + $0x2]]
    %s42 = sld [smem:[#allocation4]]
    %s43 = smul.f32 %s41, %s42
    %s44 = sadd.f32 %s40, %s43
    %s45 = scalar_lea.smem [#allocation8], 0
    %46 = sst [smem:[%s45]] %s44
    // Predicated region
    $region22: #{_total_loss.1} parent=1 // pred_check
      _
    $region23: #{_total_loss.1} parent=1 // pred_check_branch
      %48 = sbr.rel (0) target = $region25
    $region24: #{_total_loss.1} parent=1 // pred_region
      %s50 = ssub.s32 16, 16
      %51 = vsyncadd [#allocation6], %s50
      %54 = dma.smem_to_hbm [#allocation8], 16, %s4, [#allocation6]
    $region25: #{_total_loss.1} parent=1 // pred_fallthru
      _
    // Predicated region
    $region26: #{_total_loss.1} parent=1 // pred_check
      _
    $region27: #{_total_loss.1} parent=1 // pred_check_branch
      %56 = sbr.rel (0) target = $region29
    $region28: #{_total_loss.1} parent=1 // pred_region
      %57 = dma.done [#allocation6], 16
    $region29: #{_total_loss.1} parent=1 // pred_fallthru
      _
    %58 = sfence
    %59 = vsyncpa [#allocation6], 1
    %60 = vsyncpa [#allocation7], 1

</llo_original>
